<compile_context>
chip_gen: v7x
topology: tpu7x:2x2x1
jax: 0.10.0
libtpu: 0.0.40
codegen_flags: <defaults>
</compile_context>

<pallas_src>
import functools

import jax
import jax.numpy as jnp
from jax import lax
from jax.experimental import pallas as pl
from jax.experimental.pallas import tpu as pltpu


# ----------------------- kernel A: transposed conv -------------------------

def _upconv_kernel(x1_ref, wup_ref, sup_ref, out_ref, s_x1p, *, H1, W1, Cin):
    """ConvTranspose2d(k=4, s=2, p=1) as ONE tap-folded MXU matmul.

    The 4 sub-pixel output phases are the output channels of a block-sparse
    3x3 conv over the pad-1 input, stacked on the lane axis, so the kernel is
    a single (H1*W1, 9*Cin) @ (9*Cin, 4*Cout) bf16 matmul with f32 accumulate.
    Output is phase-major (H1*W1, 4*Cout); the tiny pixel interleave is done
    by XLA in the wrapper.
    """
    # Zero-padded copy of x1 in VMEM (no HBM pad round trip).
    s_x1p[...] = jnp.zeros_like(s_x1p)
    s_x1p[1:H1 + 1, 1:W1 + 1, :] = x1_ref[0].astype(s_x1p.dtype)

    # Fold all 9 taps into the contraction dimension (K = 9*Cin).
    taps = [s_x1p[dy:dy + H1, dx:dx + W1, :].reshape(H1 * W1, Cin)
            for dy in range(3) for dx in range(3)]
    patches = jnp.concatenate(taps, axis=-1).astype(jnp.bfloat16)

    y = jnp.dot(patches, wup_ref[...], preferred_element_type=jnp.float32)
    y = y + sup_ref[...]
    out_ref[0] = y.astype(out_ref.dtype)


def upconv_phase_major(x1, w_up2d, shift_up):
    """x1: (B, H1, W1, Cin) bf16 -> (B, H1*W1, 4*Cout) bf16 (phase-major)."""
    B, H1, W1, Cin = x1.shape
    four_cout = w_up2d.shape[1]
    kern = functools.partial(_upconv_kernel, H1=H1, W1=W1, Cin=Cin)
    return pl.pallas_call(
        kern,
        out_shape=jax.ShapeDtypeStruct((B, H1 * W1, four_cout), jnp.bfloat16),
        grid_spec=pltpu.PrefetchScalarGridSpec(
            num_scalar_prefetch=0,
            grid=(B,),
            in_specs=[
                pl.BlockSpec((1, H1, W1, Cin), lambda b: (b, 0, 0, 0)),
                pl.BlockSpec(w_up2d.shape, lambda b: (0, 0)),
                pl.BlockSpec(shift_up.shape, lambda b: (0, 0)),
            ],
            out_specs=pl.BlockSpec((1, H1 * W1, four_cout),
                                   lambda b: (b, 0, 0)),
            scratch_shapes=[pltpu.VMEM((H1 + 2, W1 + 2, Cin), jnp.float32)],
        ),
        compiler_params=pltpu.CompilerParams(
            dimension_semantics=("parallel",),
            vmem_limit_bytes=32 * 1024 * 1024,
        ),
    )(x1, w_up2d, shift_up)


# ------------- kernel B: fused concat + conv1 + BN/ReLU + conv2 ------------

def _convblock_kernel(y1_ref, x2_ref, w1_ref, s1_ref, w2t_ref, s2_ref,
                      out_ref, s_cat, s_h, *, OH, OW, Cup, Cskip, Cout):
    Ctot = Cup + Cskip

    # Fused channel concat [up(x1), x2] into one zero-padded VMEM image.
    s_cat[...] = jnp.zeros_like(s_cat)
    s_cat[1:OH + 1, 1:OW + 1, 0:Cup] = y1_ref[0].astype(s_cat.dtype)
    s_cat[1:OH + 1, 1:OW + 1, Cup:Ctot] = x2_ref[0].astype(s_cat.dtype)

    # conv1 (3x3, BN scale folded) + shift + ReLU: one tap-folded matmul.
    taps1 = [s_cat[dy:dy + OH, dx:dx + OW, :].reshape(OH * OW, Ctot)
             for dy in range(3) for dx in range(3)]
    p1 = jnp.concatenate(taps1, axis=-1).astype(jnp.bfloat16)
    h = jnp.dot(p1, w1_ref[...], preferred_element_type=jnp.float32)
    h = jnp.maximum(h + s1_ref[...], 0.0)

    # conv1 output never leaves VMEM: zero-padded scratch image for conv2.
    s_h[...] = jnp.zeros_like(s_h)
    s_h[1:OH + 1, 1:OW + 1, :] = h.reshape(OH, OW, Cout)

    # conv2 (3x3, BN folded) + shift + ReLU, computed TRANSPOSED so the
    # result (Cout, OH*OW) is lane-dense and already channel-major (NCHW).
    taps2 = [s_h[dy:dy + OH, dx:dx + OW, :].reshape(OH * OW, Cout)
             for dy in range(3) for dx in range(3)]
    p2 = jnp.concatenate(taps2, axis=-1).astype(jnp.bfloat16)
    y = lax.dot_general(w2t_ref[...], p2,
                        dimension_numbers=(((1,), (1,)), ((), ())),
                        preferred_element_type=jnp.float32)
    y = jnp.maximum(y + s2_ref[...], 0.0)
    out_ref[0] = y.astype(out_ref.dtype)


def convblock_pallas(y1, x2, w1_2d, shift1, w2t_2d, shift2_col):
    """y1: (B,OH,OW,Cup) bf16, x2: (B,OH,OW,Cskip) bf16 -> (B,Cout,OH*OW) f32."""
    B, OH, OW, Cup = y1.shape
    Cskip = x2.shape[-1]
    Cout = w1_2d.shape[1]
    kern = functools.partial(_convblock_kernel, OH=OH, OW=OW, Cup=Cup,
                             Cskip=Cskip, Cout=Cout)
    return pl.pallas_call(
        kern,
        out_shape=jax.ShapeDtypeStruct((B, Cout, OH * OW), jnp.float32),
        grid_spec=pltpu.PrefetchScalarGridSpec(
            num_scalar_prefetch=0,
            grid=(B,),
            in_specs=[
                pl.BlockSpec((1, OH, OW, Cup), lambda b: (b, 0, 0, 0)),
                pl.BlockSpec((1, OH, OW, Cskip), lambda b: (b, 0, 0, 0)),
                pl.BlockSpec(w1_2d.shape, lambda b: (0, 0)),
                pl.BlockSpec(shift1.shape, lambda b: (0, 0)),
                pl.BlockSpec(w2t_2d.shape, lambda b: (0, 0)),
                pl.BlockSpec(shift2_col.shape, lambda b: (0, 0)),
            ],
            out_specs=pl.BlockSpec((1, Cout, OH * OW), lambda b: (b, 0, 0)),
            scratch_shapes=[
                pltpu.VMEM((OH + 2, OW + 2, Cup + Cskip), jnp.float32),
                pltpu.VMEM((OH + 2, OW + 2, Cout), jnp.float32),
            ],
        ),
        compiler_params=pltpu.CompilerParams(
            dimension_semantics=("parallel",),
            vmem_limit_bytes=32 * 1024 * 1024,
        ),
    )(y1, x2, w1_2d, shift1, w2t_2d, shift2_col)


# ------------------------------ parameters ---------------------------------

def _fold_bn(w_hwio, b, g, be, m, v, eps=1e-5):
    scale = g / jnp.sqrt(v + eps)
    w_folded = (w_hwio * scale[None, None, None, :]).astype(jnp.bfloat16)
    shift = ((b - m) * scale + be).reshape(1, -1).astype(jnp.float32)
    return w_folded, shift


def _upconv_as_3x3(wt):
    """ConvTranspose2d(k=4,s=2,p=1) weight (Cin,Cout,4,4) -> block-sparse
    (3,3,Cin,4*Cout) weight of a stride-1 3x3 conv over the pad-1 input whose
    4*Cout output channels are the 4 sub-pixel phases p = 2*py + px."""
    cin, cout = wt.shape[0], wt.shape[1]
    w3 = jnp.zeros((3, 3, cin, 4 * cout), jnp.float32)
    for py in range(2):
        for px in range(2):
            p = 2 * py + px
            for dy in range(2):
                for dx in range(2):
                    kh = 3 - 2 * dy if py == 0 else 2 - 2 * dy
                    kw = 3 - 2 * dx if px == 0 else 2 - 2 * dx
                    w3 = w3.at[py + dy, px + dx, :,
                               p * cout:(p + 1) * cout].set(wt[:, :, kh, kw])
    return w3


def init_params(key, in_chan, out_chan):
    ks = jax.random.split(key, 14)
    P = {"out_chan": out_chan}

    # ConvTranspose2d(in_chan, out_chan, k=4, s=2, p=1): weight (in,out,4,4)
    wt = jax.random.normal(ks[0], (in_chan, out_chan, 4, 4), jnp.float32) * 0.1
    bt = jax.random.normal(ks[1], (out_chan,), jnp.float32) * 0.1
    P["wt"], P["bt"] = wt, bt
    w3 = _upconv_as_3x3(wt)                                     # (3,3,Cin,4*Cout)
    P["w_up2d"] = w3.reshape(9 * in_chan, 4 * out_chan).astype(jnp.bfloat16)
    P["shift_up"] = jnp.tile(bt, 4).reshape(1, 4 * out_chan).astype(jnp.float32)

    def conv_bn(kw_, kb_, kg_, kbe_, km_, kv_, cin, cout):
        w = jax.random.normal(kw_, (cout, cin, 3, 3), jnp.float32) * 0.1  # OIHW
        b = jax.random.normal(kb_, (cout,), jnp.float32) * 0.1
        g = 1.0 + 0.1 * jax.random.normal(kg_, (cout,), jnp.float32)
        be = 0.1 * jax.random.normal(kbe_, (cout,), jnp.float32)
        m = 0.1 * jax.random.normal(km_, (cout,), jnp.float32)
        v = 1.0 + 0.1 * jnp.abs(jax.random.normal(kv_, (cout,), jnp.float32))
        w_hwio = jnp.transpose(w, (2, 3, 1, 0))
        wf, shift = _fold_bn(w_hwio, b, g, be, m, v)
        return dict(w=w_hwio, b=b, g=g, be=be, m=m, v=v, wf=wf, shift=shift)

    c1 = conv_bn(*ks[2:8], in_chan, out_chan)   # conv on concatenated feats
    c2 = conv_bn(*ks[8:14], out_chan, out_chan)
    P["c1"], P["c2"] = c1, c2

    # Tap-folded 2D weights for the Pallas kernels (BN scale folded, bf16).
    P["w1_2d"] = c1["wf"].reshape(9 * in_chan, out_chan)          # (9*Ctot, Cout)
    P["shift1"] = c1["shift"]                                     # (1, Cout) f32
    P["w2t_2d"] = c2["wf"].reshape(9 * out_chan, out_chan).T      # (Cout, 9*Cout)
    P["shift2_col"] = c2["shift"].reshape(out_chan, 1)            # (Cout, 1) f32
    return P


# ------------------------------ forward pass -------------------------------

def up_forward(x1_nchw, x2_nchw, P):
    cout = P["out_chan"]
    x1 = jnp.transpose(x1_nchw, (0, 2, 3, 1)).astype(jnp.bfloat16)  # NHWC bf16
    x2 = jnp.transpose(x2_nchw, (0, 2, 3, 1)).astype(jnp.bfloat16)
    B, H1, W1, _ = x1.shape
    oh, ow = 2 * H1, 2 * W1

    # ConvTranspose2d(k=4,s=2,p=1): single tap-folded Pallas matmul, phases on
    # the lane axis; the tiny sub-pixel interleave is done here by XLA.
    y_ph = upconv_phase_major(x1, P["w_up2d"], P["shift_up"])  # (B,H1*W1,4*Cout)
    y1 = (y_ph.reshape(B, H1, W1, 2, 2, cout)
          .transpose(0, 1, 3, 2, 4, 5)
          .reshape(B, oh, ow, cout))

    # Fused [concat -> conv3x3+BN+ReLU -> conv3x3+BN+ReLU] in one pallas_call;
    # result is channel-major (B, Cout, OH*OW) -> plain reshape to NCHW.
    out = convblock_pallas(y1, x2, P["w1_2d"], P["shift1"],
                           P["w2t_2d"], P["shift2_col"])
    return out.reshape(B, cout, oh, ow)


# ------------------------- pure-JAX reference check ------------------------

def up_reference(x1_nchw, x2_nchw, P):
    dn = ("NHWC", "HWIO", "NHWC")
    eps = 1e-5
    # Share the kernel's bf16 input quantization; math in f32 (unfused BN).
    x1 = jnp.transpose(x1_nchw, (0, 2, 3, 1)).astype(jnp.bfloat16).astype(jnp.float32)
    x2 = jnp.transpose(x2_nchw, (0, 2, 3, 1)).astype(jnp.bfloat16).astype(jnp.float32)

    # ConvTranspose2d(k=4,s=2,p=1) == dilate(2) + pad 2 + conv4x4 (flipped W)
    wt_eq = jnp.transpose(P["wt"][:, :, ::-1, ::-1], (2, 3, 0, 1))
    y1 = lax.conv_general_dilated(
        x1, wt_eq, (1, 1), [(2, 2), (2, 2)], lhs_dilation=(2, 2),
        dimension_numbers=dn, precision=lax.Precision.HIGHEST) + P["bt"]
    x = jnp.concatenate([y1, x2], axis=-1)

    def cbr(x, c):
        y = lax.conv_general_dilated(
            x, c["w"], (1, 1), [(1, 1), (1, 1)], dimension_numbers=dn,
            precision=lax.Precision.HIGHEST) + c["b"]
        y = (y - c["m"]) / jnp.sqrt(c["v"] + eps) * c["g"] + c["be"]
        return jnp.maximum(y, 0.0)

    x = cbr(x, P["c1"])
    x = cbr(x, P["c2"])
    return jnp.transpose(x, (0, 3, 1, 2))


# ---------------------------------- main -----------------------------------

if __name__ == "__main__":
    B, in_chan, out_chan = 2, 8, 4
    H1 = W1 = 8          # x1 spatial; x2 is the skip at 2x resolution

    key = jax.random.PRNGKey(0)
    k1, k2, kp = jax.random.split(key, 3)
    x1 = jax.random.normal(k1, (B, in_chan, H1, W1), jnp.float32)
    x2 = jax.random.normal(k2, (B, in_chan - out_chan, 2 * H1, 2 * W1),
                           jnp.float32)
    params = init_params(kp, in_chan, out_chan)

    out = jax.block_until_ready(up_forward(x1, x2, params))
    ref = jax.block_until_ready(up_reference(x1, x2, params))

    assert out.shape == (B, out_chan, 2 * H1, 2 * W1), out.shape
    assert bool(jnp.all(jnp.isfinite(out)))
    max_err = float(jnp.max(jnp.abs(out - ref)))
    assert jnp.allclose(out, ref, atol=3e-2, rtol=3e-2), max_err

    print("KERNEL_OK")
</pallas_src>

<mosaic_0001>
module attributes {stable_mosaic.version = 11 : i64} {
  func.func @_upconv_kernel(%arg0: i32, %arg1: memref<1x8x8x8xbf16, #tpu.memory_space<vmem>>, %arg2: memref<72x16xbf16, #tpu.memory_space<vmem>>, %arg3: memref<1x16xf32, #tpu.memory_space<vmem>>, %arg4: memref<1x64x16xbf16, #tpu.memory_space<vmem>>, %arg5: memref<10x10x8xf32, #tpu.memory_space<vmem>>) attributes {dimension_semantics = [#tpu.dimension_semantics<parallel>], iteration_bounds = array<i64: 2>, scalar_prefetch = 0 : i64, scratch_operands = 1 : i64, tpu.core_type = #tpu.core_type<tc>, window_params = [{transform_indices = @transform_0, window_bounds = array<i64: 1, 8, 8, 8>}, {pipeline_mode = #tpu.pipeline_mode<synchronous>, transform_indices = @transform_1, window_bounds = array<i64: 72, 16>}, {pipeline_mode = #tpu.pipeline_mode<synchronous>, transform_indices = @transform_2, window_bounds = array<i64: 1, 16>}, {transform_indices = @transform_3, window_bounds = array<i64: 1, 64, 16>}]} {
    %cst = arith.constant 0.000000e+00 : f32
    %0 = vector.broadcast %cst : f32 to vector<10x10x8xf32>
    %c0 = arith.constant 0 : index
    %c0_0 = arith.constant 0 : index
    %c0_1 = arith.constant 0 : index
    %1 = vector.load %arg5[%c0, %c0_0, %c0_1] : memref<10x10x8xf32, #tpu.memory_space<vmem>>, vector<10x10x8xf32>
    tpu.vector_store %arg5[%c0, %c0_0, %c0_1], %0 {strides = array<i32>} : memref<10x10x8xf32, #tpu.memory_space<vmem>>, vector<10x10x8xf32>,
    %c0_2 = arith.constant 0 : index
    %c0_3 = arith.constant 0 : index
    %c0_4 = arith.constant 0 : index
    %c0_5 = arith.constant 0 : index
    %2 = vector.load %arg1[%c0_2, %c0_3, %c0_4, %c0_5] : memref<1x8x8x8xbf16, #tpu.memory_space<vmem>>, vector<1x8x8x8xbf16>
    %3 = vector.shape_cast %2 : vector<1x8x8x8xbf16> to vector<8x8x8xbf16>
    %4 = arith.extf %3 : vector<8x8x8xbf16> to vector<8x8x8xf32>
    %c1 = arith.constant 1 : index
    %c1_6 = arith.constant 1 : index
    %c0_7 = arith.constant 0 : index
    %5 = vector.load %arg5[%c1, %c1_6, %c0_7] : memref<10x10x8xf32, #tpu.memory_space<vmem>>, vector<8x8x8xf32>
    tpu.vector_store %arg5[%c1, %c1_6, %c0_7], %4 {strides = array<i32>} : memref<10x10x8xf32, #tpu.memory_space<vmem>>, vector<8x8x8xf32>,
    %c0_8 = arith.constant 0 : index
    %c0_9 = arith.constant 0 : index
    %c0_10 = arith.constant 0 : index
    %6 = vector.load %arg5[%c0_8, %c0_9, %c0_10] : memref<10x10x8xf32, #tpu.memory_space<vmem>>, vector<8x8x8xf32>
    %7 = vector.shape_cast %6 : vector<8x8x8xf32> to vector<64x8xf32>
    %c0_11 = arith.constant 0 : index
    %c1_12 = arith.constant 1 : index
    %c0_13 = arith.constant 0 : index
    %8 = vector.load %arg5[%c0_11, %c1_12, %c0_13] : memref<10x10x8xf32, #tpu.memory_space<vmem>>, vector<8x8x8xf32>
    %9 = vector.shape_cast %8 : vector<8x8x8xf32> to vector<64x8xf32>
    %c0_14 = arith.constant 0 : index
    %c2 = arith.constant 2 : index
    %c0_15 = arith.constant 0 : index
    %10 = vector.load %arg5[%c0_14, %c2, %c0_15] : memref<10x10x8xf32, #tpu.memory_space<vmem>>, vector<8x8x8xf32>
    %11 = vector.shape_cast %10 : vector<8x8x8xf32> to vector<64x8xf32>
    %c1_16 = arith.constant 1 : index
    %c0_17 = arith.constant 0 : index
    %c0_18 = arith.constant 0 : index
    %12 = vector.load %arg5[%c1_16, %c0_17, %c0_18] : memref<10x10x8xf32, #tpu.memory_space<vmem>>, vector<8x8x8xf32>
    %13 = vector.shape_cast %12 : vector<8x8x8xf32> to vector<64x8xf32>
    %c1_19 = arith.constant 1 : index
    %c1_20 = arith.constant 1 : index
    %c0_21 = arith.constant 0 : index
    %14 = vector.load %arg5[%c1_19, %c1_20, %c0_21] : memref<10x10x8xf32, #tpu.memory_space<vmem>>, vector<8x8x8xf32>
    %15 = vector.shape_cast %14 : vector<8x8x8xf32> to vector<64x8xf32>
    %c1_22 = arith.constant 1 : index
    %c2_23 = arith.constant 2 : index
    %c0_24 = arith.constant 0 : index
    %16 = vector.load %arg5[%c1_22, %c2_23, %c0_24] : memref<10x10x8xf32, #tpu.memory_space<vmem>>, vector<8x8x8xf32>
    %17 = vector.shape_cast %16 : vector<8x8x8xf32> to vector<64x8xf32>
    %c2_25 = arith.constant 2 : index
    %c0_26 = arith.constant 0 : index
    %c0_27 = arith.constant 0 : index
    %18 = vector.load %arg5[%c2_25, %c0_26, %c0_27] : memref<10x10x8xf32, #tpu.memory_space<vmem>>, vector<8x8x8xf32>
    %19 = vector.shape_cast %18 : vector<8x8x8xf32> to vector<64x8xf32>
    %c2_28 = arith.constant 2 : index
    %c1_29 = arith.constant 1 : index
    %c0_30 = arith.constant 0 : index
    %20 = vector.load %arg5[%c2_28, %c1_29, %c0_30] : memref<10x10x8xf32, #tpu.memory_space<vmem>>, vector<8x8x8xf32>
    %21 = vector.shape_cast %20 : vector<8x8x8xf32> to vector<64x8xf32>
    %c2_31 = arith.constant 2 : index
    %c2_32 = arith.constant 2 : index
    %c0_33 = arith.constant 0 : index
    %22 = vector.load %arg5[%c2_31, %c2_32, %c0_33] : memref<10x10x8xf32, #tpu.memory_space<vmem>>, vector<8x8x8xf32>
    %23 = vector.shape_cast %22 : vector<8x8x8xf32> to vector<64x8xf32>
    %24 = tpu.concatenate %7, %9, %11, %13, %15, %17, %19, %21, %23 in 1 : vector<64x8xf32>, vector<64x8xf32>, vector<64x8xf32>, vector<64x8xf32>, vector<64x8xf32>, vector<64x8xf32>, vector<64x8xf32>, vector<64x8xf32>, vector<64x8xf32> -> vector<64x72xf32>
    %25 = arith.truncf %24 : vector<64x72xf32> to vector<64x72xbf16>
    %c0_34 = arith.constant 0 : index
    %c0_35 = arith.constant 0 : index
    %26 = vector.load %arg2[%c0_34, %c0_35] : memref<72x16xbf16, #tpu.memory_space<vmem>>, vector<72x16xbf16>
    %cst_36 = arith.constant dense<0.000000e+00> : vector<64x16xf32>
    %27 = tpu.matmul %25, %26, %cst_36 {dimension_numbers = #tpu.dot_dimension_numbers<[1], [0], [0], [1], [0, 0, 1, 1], [], []>} : vector<64x72xbf16>, vector<72x16xbf16>, vector<64x16xf32> -> vector<64x16xf32>
    %c0_37 = arith.constant 0 : index
    %c0_38 = arith.constant 0 : index
    %28 = vector.load %arg3[%c0_37, %c0_38] : memref<1x16xf32, #tpu.memory_space<vmem>>, vector<1x16xf32>
    %29 = vector.broadcast %28 : vector<1x16xf32> to vector<64x16xf32>
    %30 = arith.addf %27, %29 : vector<64x16xf32>
    %31 = arith.truncf %30 : vector<64x16xf32> to vector<64x16xbf16>
    %c0_39 = arith.constant 0 : index
    %c0_40 = arith.constant 0 : index
    %c0_41 = arith.constant 0 : index
    %32 = vector.load %arg4[%c0_39, %c0_40, %c0_41] : memref<1x64x16xbf16, #tpu.memory_space<vmem>>, vector<1x64x16xbf16>
    %33 = vector.shape_cast %32 : vector<1x64x16xbf16> to vector<64x16xbf16>
    %34 = vector.shape_cast %31 : vector<64x16xbf16> to vector<1x64x16xbf16>
    tpu.vector_store %arg4[%c0_39, %c0_40, %c0_41], %34 {strides = array<i32>} : memref<1x64x16xbf16, #tpu.memory_space<vmem>>, vector<1x64x16xbf16>,
    return
  }
  func.func @transform_0(%arg0: i32) -> (i32, i32, i32, i32) {
    %c0_i32 = arith.constant 0 : i32
    %c0_i32_0 = arith.constant 0 : i32
    %c0_i32_1 = arith.constant 0 : i32
    %c0_i32_2 = arith.constant 0 : i32
    return %arg0, %c0_i32, %c0_i32_0, %c0_i32_1 : i32, i32, i32, i32
  }
  func.func @transform_1(%arg0: i32) -> (i32, i32) {
    %c0_i32 = arith.constant 0 : i32
    %c0_i32_0 = arith.constant 0 : i32
    %c0_i32_1 = arith.constant 0 : i32
    return %c0_i32, %c0_i32_0 : i32, i32
  }
  func.func @transform_2(%arg0: i32) -> (i32, i32) {
    %c0_i32 = arith.constant 0 : i32
    %c0_i32_0 = arith.constant 0 : i32
    %c0_i32_1 = arith.constant 0 : i32
    return %c0_i32, %c0_i32_0 : i32, i32
  }
  func.func @transform_3(%arg0: i32) -> (i32, i32, i32) {
    %c0_i32 = arith.constant 0 : i32
    %c0_i32_0 = arith.constant 0 : i32
    %c0_i32_1 = arith.constant 0 : i32
    return %arg0, %c0_i32, %c0_i32_0 : i32, i32, i32
  }
}

</mosaic_0001>

<llo_original>
// kernel: tpu_custom_call.1
$region0: #{tpu_custom_call.1}
  #allocation0 [shape = 'u32[]', space=smem, size = 0x4, offset = 0x4, fixed_abs, tag = 'smem constant byte address 0x4 - core index']
  #allocation1 [shape = 'u32[144,128]{1,0:T(1,128)}', space=vmem, size = 0x12000, scoped, tag = 'internal scratch']
  #allocation2 [shape = 'f32[10,10,8]{2,1,0:T(8,128)}', space=vmem, size = 0x14000, scoped, tag = 'scratch operand']
  %s0 = inlined_call_operand.hbm [shape: bf16[2,8,8,8], index: 0, kind: input, shape index: {}]
  %s1 = inlined_call_operand.vmem [shape: bf16[72,16], index: 1, kind: input, shape index: {}]
  %s2 = inlined_call_operand.vmem [shape: f32[1,16], index: 2, kind: input, shape index: {}]
  %s3 = inlined_call_operand.vmem [shape: bf16[2,64,16], index: 3, kind: output, shape index: {}]
  %s4 = sld [smem:[#allocation0]]
  $region49: #{tpu_custom_call.1} parent=0
    _
  %s6 = ssub.s32 1, %s4
  %s7 = scalar_select 0, %s6, %s4
  $region1: #{tpu_custom_call.1} parent=0
    #allocation3 [shape = 'u8[32768]{0}', space=vmem, size = 0x8000, scoped, tag = 'input window, operand 0']
    #allocation4 [shape = 's32[2]{0}', space=sflag, size = 0x8, scoped, tag = 'scoped memory for tpu_custom_call.1']
    %8 = vsyncpa [#allocation4], 0
    %s9 = scalar_lea.sflag [#allocation4], 1
    %10 = vsyncpa %s9, 0
    loop: start=0, step=1, limit=4
    $region2: #{tpu_custom_call.1} parent=1 // loop_pre_header
      _
    $region3: #{tpu_custom_call.1} parent=1 // loop_header
      %s12 = sphi 0, %s16
      %p13 = scmp.ge.s32.totalorder %s12, 4
      %s22 = sphi 0, %s24
      %s25 = sphi 0, %s22
      %s26 = sphi 0, %s25
      %s42 = sphi 0, %s26
      %s46 = sphi 0, %s46
      %s48 = sphi 0, %s46
      %s49 = sphi 0, %s48
      %s63 = sphi 0, %s49
      %s67 = sphi 0, %s67
      %s69 = sphi 0, %s67
      %s70 = sphi 0, %s69
      %s84 = sphi 0, %s70
      %s90 = sphi 0, %s92
      %s93 = sphi 0, %s90
      %s94 = sphi 0, %s93
      %s110 = sphi 0, %s94
    $region4: #{tpu_custom_call.1} parent=1 // loop_header_branch
      %15 = sbr.rel (%p13) target = $region8
    $region5: #{tpu_custom_call.1} parent=1 // loop_body
      %s17 = ssub.s32 %s12, 1
      %s18 = ssub.s32 %s12, 2
      %s19 = sadd.s32 %s12, 1
      %s20 = ssub.s32 %s12, %s19
      %p21 = scmp.eq.s32.totalorder %s20, 0
      %s23 = sadd.s32 %s22, 1
      %s24 = scalar_select %p21, %s22, %s23
      %p27 = pneg %p21
      %p28 = scmp.eq.s32.totalorder %s12, 1
      %p29 = por %p27, %p28
      %p30 = scmp.ne.s32.totalorder %s22, %s25
      %p31 = scmp.eq.s32.totalorder %s12, 0
      %p32 = por %p30, %p31
      %p33 = scmp.ne.s32.totalorder %s22, %s25
      %p34 = scmp.eq.s32.totalorder %s17, 1
      %p35 = por %p33, %p34
      %p36 = scmp.ne.s32.totalorder %s25, %s26
      %p37 = scmp.eq.s32.totalorder %s17, 0
      %p38 = por %p36, %p37
      %p39 = scmp.ne.s32.totalorder %s25, %s26
      %p40 = scmp.eq.s32.totalorder %s18, 1
      %p41 = por %p39, %p40
      %p43 = scmp.ne.s32.totalorder %s26, %s42
      %p44 = scmp.eq.s32.totalorder %s18, 0
      %p45 = por %p43, %p44
      %s47 = sadd.s32 %s46, 1
      %p50 = scmp.eq.s32.totalorder %s12, 1
      %p51 = scmp.ne.s32.totalorder %s46, %s48
      %p52 = scmp.eq.s32.totalorder %s12, 0
      %p53 = por %p51, %p52
      %p54 = scmp.ne.s32.totalorder %s46, %s48
      %p55 = scmp.eq.s32.totalorder %s17, 1
      %p56 = por %p54, %p55
      %p57 = scmp.ne.s32.totalorder %s48, %s49
      %p58 = scmp.eq.s32.totalorder %s17, 0
      %p59 = por %p57, %p58
      %p60 = scmp.ne.s32.totalorder %s48, %s49
      %p61 = scmp.eq.s32.totalorder %s18, 1
      %p62 = por %p60, %p61
      %p64 = scmp.ne.s32.totalorder %s49, %s63
      %p65 = scmp.eq.s32.totalorder %s18, 0
      %p66 = por %p64, %p65
      %s68 = sadd.s32 %s67, 1
      %p71 = scmp.eq.s32.totalorder %s12, 1
      %p72 = scmp.ne.s32.totalorder %s67, %s69
      %p73 = scmp.eq.s32.totalorder %s12, 0
      %p74 = por %p72, %p73
      %p75 = scmp.ne.s32.totalorder %s67, %s69
      %p76 = scmp.eq.s32.totalorder %s17, 1
      %p77 = por %p75, %p76
      %p78 = scmp.ne.s32.totalorder %s69, %s70
      %p79 = scmp.eq.s32.totalorder %s17, 0
      %p80 = por %p78, %p79
      %p81 = scmp.ne.s32.totalorder %s69, %s70
      %p82 = scmp.eq.s32.totalorder %s18, 1
      %p83 = por %p81, %p82
      %p85 = scmp.ne.s32.totalorder %s70, %s84
      %p86 = scmp.eq.s32.totalorder %s18, 0
      %p87 = por %p85, %p86
      %s88 = ssub.s32 %s12, %s19
      %p89 = scmp.eq.s32.totalorder %s88, 0
      %s91 = sadd.s32 %s90, 1
      %s92 = scalar_select %p89, %s90, %s91
      %p95 = pneg %p89
      %p96 = scmp.eq.s32.totalorder %s12, 1
      %p97 = por %p95, %p96
      %p98 = scmp.ne.s32.totalorder %s90, %s93
      %p99 = scmp.eq.s32.totalorder %s12, 0
      %p100 = por %p98, %p99
      %p101 = scmp.ne.s32.totalorder %s90, %s93
      %p102 = scmp.eq.s32.totalorder %s17, 1
      %p103 = por %p101, %p102
      %p104 = scmp.ne.s32.totalorder %s93, %s94
      %p105 = scmp.eq.s32.totalorder %s17, 0
      %p106 = por %p104, %p105
      %p107 = scmp.ne.s32.totalorder %s93, %s94
      %p108 = scmp.eq.s32.totalorder %s18, 1
      %p109 = por %p107, %p108
      %p111 = scmp.ne.s32.totalorder %s94, %s110
      %p112 = scmp.eq.s32.totalorder %s18, 0
      %p113 = por %p111, %p112
      %p114 = scmp.le.s32.totalorder 1, %s12
      %p115 = scmp.lt.s32.totalorder %s12, 3
      %p116 = pnand %p114, %p115
      %p117 = pneg %p116
      // Predicated region
      $region9: #{tpu_custom_call.1} parent=5 // pred_check
        _
      $region10: #{tpu_custom_call.1} parent=5 // pred_check_branch
        %119 = sbr.rel (%p116) target = $region12
      $region11: #{tpu_custom_call.1} parent=5 // pred_region
        %s120 = ssub.s32 %s12, 1
        // Predicated region
        $region13: #{tpu_custom_call.1} parent=11 // pred_check
          %p121 = pneg %p59
        $region14: #{tpu_custom_call.1} parent=11 // pred_check_branch
          %123 = sbr.rel (%p121) target = $region16
        $region15: #{tpu_custom_call.1} parent=11 // pred_region
          _
        $region16: #{tpu_custom_call.1} parent=11 // pred_fallthru
          _
        // Predicated region
        $region17: #{tpu_custom_call.1} parent=11 // pred_check
          %p124 = pneg %p80
        $region18: #{tpu_custom_call.1} parent=11 // pred_check_branch
          %126 = sbr.rel (%p124) target = $region20
        $region19: #{tpu_custom_call.1} parent=11 // pred_region
          _
        $region20: #{tpu_custom_call.1} parent=11 // pred_fallthru
          _
      $region12: #{tpu_custom_call.1} parent=5 // pred_fallthru
        _
      %p127 = scmp.lt.s32.totalorder %s12, 2
      // Predicated region
      $region21: #{tpu_custom_call.1} parent=5 // pred_check
        %p128 = pneg %p127
      $region22: #{tpu_custom_call.1} parent=5 // pred_check_branch
        %130 = sbr.rel (%p128) target = $region24
      $region23: #{tpu_custom_call.1} parent=5 // pred_region
        // Predicated region
        $region25: #{tpu_custom_call.1} parent=23 // pred_check
          %p131 = pneg %p32
        $region26: #{tpu_custom_call.1} parent=23 // pred_check_branch
          %133 = sbr.rel (%p131) target = $region28
        $region27: #{tpu_custom_call.1} parent=23 // pred_region
          %s134 = sand.u32 %s22, 1
          %s135 = scalar_lea.sflag [#allocation4], %s134
          %s136 = sand.u32 %s22, 1
          %s137 = smul.addr %s136, 32
          %s138 = scalar_lea.vmem [#allocation3], %s137
          %s140 = ssub.s32 512, 512
          %141 = vsyncadd %s135, %s140
          %s142 = smul.addr %s12, 8
          %s143 = smul.addr %s142, 64
          %s144 = scalar_lea.hbm %s0, %s143
          %s145 = sshll.u32 %s138, 4
          %s146 = int_to_ptr.vmem [resolvable:$true] %s145
          %151 = dma.hbm_to_vmem [thread:$0]  %s144, 512, %s146, %s135, 64, 64, 4
        $region28: #{tpu_custom_call.1} parent=23 // pred_fallthru
          _
      $region24: #{tpu_custom_call.1} parent=5 // pred_fallthru
        _
      %p152 = scmp.le.s32.totalorder 1, %s12
      %p153 = scmp.lt.s32.totalorder %s12, 3
      %p154 = pnand %p152, %p153
      %p155 = pneg %p154
      // Predicated region
      $region29: #{tpu_custom_call.1} parent=5 // pred_check
        _
      $region30: #{tpu_custom_call.1} parent=5 // pred_check_branch
        %157 = sbr.rel (%p154) target = $region32
      $region31: #{tpu_custom_call.1} parent=5 // pred_region
        %s158 = ssub.s32 %s12, 1
        %s159 = sand.u32 %s25, 1
        %s160 = scalar_lea.sflag [#allocation4], %s159
        %s161 = sand.u32 %s25, 1
        %s162 = smul.addr %s161, 32
        %s163 = scalar_lea.vmem [#allocation3], %s162
        // Predicated region
        $region33: #{tpu_custom_call.1} parent=31 // pred_check
          %p164 = pneg %p38
        $region34: #{tpu_custom_call.1} parent=31 // pred_check_branch
          %166 = sbr.rel (%p164) target = $region36
        $region35: #{tpu_custom_call.1} parent=31 // pred_region
          %167 = dma.done %s160, 512
        $region36: #{tpu_custom_call.1} parent=31 // pred_fallthru
          _
        %s168 = sand.u32 %s25, 1
        %s169 = scalar_lea.sflag [#allocation4], %s168
        %s170 = sand.u32 %s25, 1
        %s171 = smul.addr %s170, 32
        %s172 = scalar_lea.vmem [#allocation3], %s171
        %p173 = pneg %p38
        %p174 = pneg %p35
        %p175 = pneg %p59
        %p176 = pneg %p56
        %p177 = pneg %p80
        %p178 = pneg %p77
        %p179 = pneg %p106
        %p180 = pneg %p103
        %p181 = scmp.lt.s32.totalorder %s17, 1
        %s182 = scalar_select %p181, %s17, 1
        %s183 = smul.addr %s182, 8
        %s184 = smul.addr %s183, 4
        %s185 = scalar_lea.vmem %s3, %s184
        %p186 = scmp.lt.s32.totalorder %s17, 1
        %s187 = scalar_select %p186, %s17, 1
        %s188 = smul.addr %s187, 8
        %s189 = smul.addr %s188, 4
        %s190 = scalar_lea.vmem %s3, %s189
        %vm192 = vcmask 64512
        %193 = vst.msk [vmem:[#allocation2] sm:$0xff] %vm192, 0.0
        %vm194 = vcmask 58368
        %195 = vst.msk [vmem:[#allocation2 + $0x8] sm:$0x3] %vm194, 0.0
        %196 = vst.msk [vmem:[#allocation2 + $0x10] sm:$0xff] %vm192, 0.0
        %197 = vst.msk [vmem:[#allocation2 + $0x18] sm:$0x3] %vm194, 0.0
        %198 = vst.msk [vmem:[#allocation2 + $0x20] sm:$0xff] %vm192, 0.0
        %199 = vst.msk [vmem:[#allocation2 + $0x28] sm:$0x3] %vm194, 0.0
        %200 = vst.msk [vmem:[#allocation2 + $0x30] sm:$0xff] %vm192, 0.0
        %201 = vst.msk [vmem:[#allocation2 + $0x38] sm:$0x3] %vm194, 0.0
        %202 = vst.msk [vmem:[#allocation2 + $0x40] sm:$0xff] %vm192, 0.0
        %203 = vst.msk [vmem:[#allocation2 + $0x48] sm:$0x3] %vm194, 0.0
        %204 = vst.msk [vmem:[#allocation2 + $0x50] sm:$0xff] %vm192, 0.0
        %205 = vst.msk [vmem:[#allocation2 + $0x58] sm:$0x3] %vm194, 0.0
        %206 = vst.msk [vmem:[#allocation2 + $0x60] sm:$0xff] %vm192, 0.0
        %207 = vst.msk [vmem:[#allocation2 + $0x68] sm:$0x3] %vm194, 0.0
        %208 = vst.msk [vmem:[#allocation2 + $0x70] sm:$0xff] %vm192, 0.0
        %209 = vst.msk [vmem:[#allocation2 + $0x78] sm:$0x3] %vm194, 0.0
        %210 = vst.msk [vmem:[#allocation2 + $0x80] sm:$0xff] %vm192, 0.0
        %211 = vst.msk [vmem:[#allocation2 + $0x88] sm:$0x3] %vm194, 0.0
        %212 = vst.msk [vmem:[#allocation2 + $0x90] sm:$0xff] %vm192, 0.0
        %213 = vst.msk [vmem:[#allocation2 + $0x98] sm:$0x3] %vm194, 0.0
        %v214 = vld [vmem:[%s163] sm:$0xf]
        %v215 = vld [vmem:[%s163 + $0x4] sm:$0xf]
        %v216 = vld [vmem:[%s163 + $0x8] sm:$0xf]
        %v217 = vld [vmem:[%s163 + $0xc] sm:$0xf]
        %v218 = vld [vmem:[%s163 + $0x10] sm:$0xf]
        %v219 = vld [vmem:[%s163 + $0x14] sm:$0xf]
        %v220 = vld [vmem:[%s163 + $0x18] sm:$0xf]
        %v221 = vld [vmem:[%s163 + $0x1c] sm:$0xf]
        %v222 = vunpack.c.l.bf16 %v214
        %v223 = vunpack.c.l.bf16 %v215
        %v224 = vunpack.c.l.bf16 %v216
        %v225 = vunpack.c.l.bf16 %v217
        %v226 = vunpack.c.l.bf16 %v218
        %v227 = vunpack.c.l.bf16 %v219
        %v228 = vunpack.c.l.bf16 %v220
        %v229 = vunpack.c.l.bf16 %v221
        %s230 = scalar_lea.vmem [#allocation2], 16
        %231 = vst.msk [vmem:[%s230 + $0x1] sm:$0xff] %vm192, %v222
        %232 = vst.msk [vmem:[%s230 + $0x11] sm:$0xff] %vm192, %v223
        %233 = vst.msk [vmem:[%s230 + $0x21] sm:$0xff] %vm192, %v224
        %234 = vst.msk [vmem:[%s230 + $0x31] sm:$0xff] %vm192, %v225
        %235 = vst.msk [vmem:[%s230 + $0x41] sm:$0xff] %vm192, %v226
        %236 = vst.msk [vmem:[%s230 + $0x51] sm:$0xff] %vm192, %v227
        %237 = vst.msk [vmem:[%s230 + $0x61] sm:$0xff] %vm192, %v228
        %238 = vst.msk [vmem:[%s230 + $0x71] sm:$0xff] %vm192, %v229
        %v239 = vld [vmem:[#allocation2] sm:$0xff]
        %v240 = vld [vmem:[#allocation2 + $0x10] sm:$0xff]
        %v241 = vld [vmem:[#allocation2 + $0x20] sm:$0xff]
        %v242 = vld [vmem:[#allocation2 + $0x30] sm:$0xff]
        %v243 = vld [vmem:[#allocation2 + $0x40] sm:$0xff]
        %v244 = vld [vmem:[#allocation2 + $0x50] sm:$0xff]
        %v245 = vld [vmem:[#allocation2 + $0x60] sm:$0xff]
        %v246 = vld [vmem:[#allocation2 + $0x70] sm:$0xff]
        %v247 = vld [vmem:[#allocation2 + $0x1] sm:$0xff]
        %v248 = vld [vmem:[#allocation2 + $0x11] sm:$0xff]
        %v249 = vld [vmem:[#allocation2 + $0x21] sm:$0xff]
        %v250 = vld [vmem:[#allocation2 + $0x31] sm:$0xff]
        %v251 = vld [vmem:[#allocation2 + $0x41] sm:$0xff]
        %v252 = vld [vmem:[#allocation2 + $0x51] sm:$0xff]
        %v253 = vld [vmem:[#allocation2 + $0x61] sm:$0xff]
        %v254 = vld [vmem:[#allocation2 + $0x71] sm:$0xff]
        %v255 = vld [vmem:[#allocation2 + $0x2] sm:$0xff]
        %v256 = vld [vmem:[#allocation2 + $0x12] sm:$0xff]
        %v257 = vld [vmem:[#allocation2 + $0x22] sm:$0xff]
        %v258 = vld [vmem:[#allocation2 + $0x32] sm:$0xff]
        %v259 = vld [vmem:[#allocation2 + $0x42] sm:$0xff]
        %v260 = vld [vmem:[#allocation2 + $0x52] sm:$0xff]
        %v261 = vld [vmem:[#allocation2 + $0x62] sm:$0xff]
        %v262 = vld [vmem:[#allocation2 + $0x72] sm:$0xff]
        %v263 = vld [vmem:[%s230] sm:$0xff]
        %v264 = vld [vmem:[%s230 + $0x10] sm:$0xff]
        %v265 = vld [vmem:[%s230 + $0x20] sm:$0xff]
        %v266 = vld [vmem:[%s230 + $0x30] sm:$0xff]
        %v267 = vld [vmem:[%s230 + $0x40] sm:$0xff]
        %v268 = vld [vmem:[%s230 + $0x50] sm:$0xff]
        %v269 = vld [vmem:[%s230 + $0x60] sm:$0xff]
        %v270 = vld [vmem:[%s230 + $0x70] sm:$0xff]
        %v271 = vld [vmem:[%s230 + $0x1] sm:$0xff]
        %v272 = vld [vmem:[%s230 + $0x11] sm:$0xff]
        %v273 = vld [vmem:[%s230 + $0x21] sm:$0xff]
        %v274 = vld [vmem:[%s230 + $0x31] sm:$0xff]
        %v275 = vld [vmem:[%s230 + $0x41] sm:$0xff]
        %v276 = vld [vmem:[%s230 + $0x51] sm:$0xff]
        %v277 = vld [vmem:[%s230 + $0x61] sm:$0xff]
        %v278 = vld [vmem:[%s230 + $0x71] sm:$0xff]
        %v279 = vld [vmem:[%s230 + $0x2] sm:$0xff]
        %v280 = vld [vmem:[%s230 + $0x12] sm:$0xff]
        %v281 = vld [vmem:[%s230 + $0x22] sm:$0xff]
        %v282 = vld [vmem:[%s230 + $0x32] sm:$0xff]
        %v283 = vld [vmem:[%s230 + $0x42] sm:$0xff]
        %v284 = vld [vmem:[%s230 + $0x52] sm:$0xff]
        %v285 = vld [vmem:[%s230 + $0x62] sm:$0xff]
        %v286 = vld [vmem:[%s230 + $0x72] sm:$0xff]
        %s287 = scalar_lea.vmem [#allocation2], 32
        %v288 = vld [vmem:[%s287] sm:$0xff]
        %v289 = vld [vmem:[%s287 + $0x10] sm:$0xff]
        %v290 = vld [vmem:[%s287 + $0x20] sm:$0xff]
        %v291 = vld [vmem:[%s287 + $0x30] sm:$0xff]
        %v292 = vld [vmem:[%s287 + $0x40] sm:$0xff]
        %v293 = vld [vmem:[%s287 + $0x50] sm:$0xff]
        %v294 = vld [vmem:[%s287 + $0x60] sm:$0xff]
        %v295 = vld [vmem:[%s287 + $0x70] sm:$0xff]
        %v296 = vld [vmem:[%s287 + $0x1] sm:$0xff]
        %v297 = vld [vmem:[%s287 + $0x11] sm:$0xff]
        %v298 = vld [vmem:[%s287 + $0x21] sm:$0xff]
        %v299 = vld [vmem:[%s287 + $0x31] sm:$0xff]
        %v300 = vld [vmem:[%s287 + $0x41] sm:$0xff]
        %v301 = vld [vmem:[%s287 + $0x51] sm:$0xff]
        %v302 = vld [vmem:[%s287 + $0x61] sm:$0xff]
        %v303 = vld [vmem:[%s287 + $0x71] sm:$0xff]
        %v304 = vld [vmem:[%s287 + $0x2] sm:$0xff]
        %v305 = vld [vmem:[%s287 + $0x12] sm:$0xff]
        %v306 = vld [vmem:[%s287 + $0x22] sm:$0xff]
        %v307 = vld [vmem:[%s287 + $0x32] sm:$0xff]
        %v308 = vld [vmem:[%s287 + $0x42] sm:$0xff]
        %v309 = vld [vmem:[%s287 + $0x52] sm:$0xff]
        %v310 = vld [vmem:[%s287 + $0x62] sm:$0xff]
        %v311 = vld [vmem:[%s287 + $0x72] sm:$0xff]
        %320 = vrot.lane.b32.xlu0 %v247, 8
        %v321 = vpop.permute.xlu0 %320
        %322 = vrot.lane.b32.xlu0 %v248, 8
        %v323 = vpop.permute.xlu0 %322
        %324 = vrot.lane.b32.xlu0 %v249, 8
        %v325 = vpop.permute.xlu0 %324
        %326 = vrot.lane.b32.xlu0 %v250, 8
        %v327 = vpop.permute.xlu0 %326
        %328 = vrot.lane.b32.xlu0 %v251, 8
        %v329 = vpop.permute.xlu0 %328
        %330 = vrot.lane.b32.xlu0 %v252, 8
        %v331 = vpop.permute.xlu0 %330
        %332 = vrot.lane.b32.xlu0 %v253, 8
        %v333 = vpop.permute.xlu0 %332
        %334 = vrot.lane.b32.xlu0 %v254, 8
        %v335 = vpop.permute.xlu0 %334
        %352 = vrot.lane.b32.xlu0 %v255, 16
        %v353 = vpop.permute.xlu0 %352
        %354 = vrot.lane.b32.xlu0 %v256, 16
        %v355 = vpop.permute.xlu0 %354
        %356 = vrot.lane.b32.xlu0 %v257, 16
        %v357 = vpop.permute.xlu0 %356
        %358 = vrot.lane.b32.xlu0 %v258, 16
        %v359 = vpop.permute.xlu0 %358
        %360 = vrot.lane.b32.xlu0 %v259, 16
        %v361 = vpop.permute.xlu0 %360
        %362 = vrot.lane.b32.xlu0 %v260, 16
        %v363 = vpop.permute.xlu0 %362
        %364 = vrot.lane.b32.xlu0 %v261, 16
        %v365 = vpop.permute.xlu0 %364
        %366 = vrot.lane.b32.xlu0 %v262, 16
        %v367 = vpop.permute.xlu0 %366
        %384 = vrot.lane.b32.xlu0 %v263, 24
        %v385 = vpop.permute.xlu0 %384
        %386 = vrot.lane.b32.xlu0 %v264, 24
        %v387 = vpop.permute.xlu0 %386
        %388 = vrot.lane.b32.xlu0 %v265, 24
        %v389 = vpop.permute.xlu0 %388
        %390 = vrot.lane.b32.xlu0 %v266, 24
        %v391 = vpop.permute.xlu0 %390
        %392 = vrot.lane.b32.xlu0 %v267, 24
        %v393 = vpop.permute.xlu0 %392
        %394 = vrot.lane.b32.xlu0 %v268, 24
        %v395 = vpop.permute.xlu0 %394
        %396 = vrot.lane.b32.xlu0 %v269, 24
        %v397 = vpop.permute.xlu0 %396
        %398 = vrot.lane.b32.xlu0 %v270, 24
        %v399 = vpop.permute.xlu0 %398
        %416 = vrot.lane.b32.xlu0 %v271, 32
        %v417 = vpop.permute.xlu0 %416
        %418 = vrot.lane.b32.xlu0 %v272, 32
        %v419 = vpop.permute.xlu0 %418
        %420 = vrot.lane.b32.xlu0 %v273, 32
        %v421 = vpop.permute.xlu0 %420
        %422 = vrot.lane.b32.xlu0 %v274, 32
        %v423 = vpop.permute.xlu0 %422
        %424 = vrot.lane.b32.xlu0 %v275, 32
        %v425 = vpop.permute.xlu0 %424
        %426 = vrot.lane.b32.xlu0 %v276, 32
        %v427 = vpop.permute.xlu0 %426
        %428 = vrot.lane.b32.xlu0 %v277, 32
        %v429 = vpop.permute.xlu0 %428
        %430 = vrot.lane.b32.xlu0 %v278, 32
        %v431 = vpop.permute.xlu0 %430
        %448 = vrot.lane.b32.xlu0 %v279, 40
        %v449 = vpop.permute.xlu0 %448
        %450 = vrot.lane.b32.xlu0 %v280, 40
        %v451 = vpop.permute.xlu0 %450
        %452 = vrot.lane.b32.xlu0 %v281, 40
        %v453 = vpop.permute.xlu0 %452
        %454 = vrot.lane.b32.xlu0 %v282, 40
        %v455 = vpop.permute.xlu0 %454
        %456 = vrot.lane.b32.xlu0 %v283, 40
        %v457 = vpop.permute.xlu0 %456
        %458 = vrot.lane.b32.xlu0 %v284, 40
        %v459 = vpop.permute.xlu0 %458
        %460 = vrot.lane.b32.xlu0 %v285, 40
        %v461 = vpop.permute.xlu0 %460
        %462 = vrot.lane.b32.xlu0 %v286, 40
        %v463 = vpop.permute.xlu0 %462
        %480 = vrot.lane.b32.xlu0 %v288, 48
        %v481 = vpop.permute.xlu0 %480
        %482 = vrot.lane.b32.xlu0 %v289, 48
        %v483 = vpop.permute.xlu0 %482
        %484 = vrot.lane.b32.xlu0 %v290, 48
        %v485 = vpop.permute.xlu0 %484
        %486 = vrot.lane.b32.xlu0 %v291, 48
        %v487 = vpop.permute.xlu0 %486
        %488 = vrot.lane.b32.xlu0 %v292, 48
        %v489 = vpop.permute.xlu0 %488
        %490 = vrot.lane.b32.xlu0 %v293, 48
        %v491 = vpop.permute.xlu0 %490
        %492 = vrot.lane.b32.xlu0 %v294, 48
        %v493 = vpop.permute.xlu0 %492
        %494 = vrot.lane.b32.xlu0 %v295, 48
        %v495 = vpop.permute.xlu0 %494
        %512 = vrot.lane.b32.xlu0 %v296, 56
        %v513 = vpop.permute.xlu0 %512
        %514 = vrot.lane.b32.xlu0 %v297, 56
        %v515 = vpop.permute.xlu0 %514
        %516 = vrot.lane.b32.xlu0 %v298, 56
        %v517 = vpop.permute.xlu0 %516
        %518 = vrot.lane.b32.xlu0 %v299, 56
        %v519 = vpop.permute.xlu0 %518
        %520 = vrot.lane.b32.xlu0 %v300, 56
        %v521 = vpop.permute.xlu0 %520
        %522 = vrot.lane.b32.xlu0 %v301, 56
        %v523 = vpop.permute.xlu0 %522
        %524 = vrot.lane.b32.xlu0 %v302, 56
        %v525 = vpop.permute.xlu0 %524
        %526 = vrot.lane.b32.xlu0 %v303, 56
        %v527 = vpop.permute.xlu0 %526
        %544 = vrot.lane.b32.xlu0 %v304, 64
        %v545 = vpop.permute.xlu0 %544
        %546 = vrot.lane.b32.xlu0 %v305, 64
        %v547 = vpop.permute.xlu0 %546
        %548 = vrot.lane.b32.xlu0 %v306, 64
        %v549 = vpop.permute.xlu0 %548
        %550 = vrot.lane.b32.xlu0 %v307, 64
        %v551 = vpop.permute.xlu0 %550
        %552 = vrot.lane.b32.xlu0 %v308, 64
        %v553 = vpop.permute.xlu0 %552
        %554 = vrot.lane.b32.xlu0 %v309, 64
        %v555 = vpop.permute.xlu0 %554
        %556 = vrot.lane.b32.xlu0 %v310, 64
        %v557 = vpop.permute.xlu0 %556
        %558 = vrot.lane.b32.xlu0 %v311, 64
        %v559 = vpop.permute.xlu0 %558
        %v568 = vsel %vm192, %v239, %v321
        %v569 = vsel %vm192, %v240, %v323
        %v570 = vsel %vm192, %v241, %v325
        %v571 = vsel %vm192, %v242, %v327
        %v572 = vsel %vm192, %v243, %v329
        %v573 = vsel %vm192, %v244, %v331
        %v574 = vsel %vm192, %v245, %v333
        %v575 = vsel %vm192, %v246, %v335
        %vm576 = vcmask 130048
        %v577 = vsel %vm576, %v568, %v353
        %v578 = vsel %vm576, %v569, %v355
        %v579 = vsel %vm576, %v570, %v357
        %v580 = vsel %vm576, %v571, %v359
        %v581 = vsel %vm576, %v572, %v361
        %v582 = vsel %vm576, %v573, %v363
        %v583 = vsel %vm576, %v574, %v365
        %v584 = vsel %vm576, %v575, %v367
        %vm585 = vcmask 195584
        %v586 = vsel %vm585, %v577, %v385
        %v587 = vsel %vm585, %v578, %v387
        %v588 = vsel %vm585, %v579, %v389
        %v589 = vsel %vm585, %v580, %v391
        %v590 = vsel %vm585, %v581, %v393
        %v591 = vsel %vm585, %v582, %v395
        %v592 = vsel %vm585, %v583, %v397
        %v593 = vsel %vm585, %v584, %v399
        %vm594 = vcmask 261120
        %v595 = vsel %vm594, %v586, %v417
        %v596 = vsel %vm594, %v587, %v419
        %v597 = vsel %vm594, %v588, %v421
        %v598 = vsel %vm594, %v589, %v423
        %v599 = vsel %vm594, %v590, %v425
        %v600 = vsel %vm594, %v591, %v427
        %v601 = vsel %vm594, %v592, %v429
        %v602 = vsel %vm594, %v593, %v431
        %vm603 = vcmask 326656
        %v604 = vsel %vm603, %v595, %v449
        %v605 = vsel %vm603, %v596, %v451
        %v606 = vsel %vm603, %v597, %v453
        %v607 = vsel %vm603, %v598, %v455
        %v608 = vsel %vm603, %v599, %v457
        %v609 = vsel %vm603, %v600, %v459
        %v610 = vsel %vm603, %v601, %v461
        %v611 = vsel %vm603, %v602, %v463
        %vm612 = vcmask 392192
        %v613 = vsel %vm612, %v604, %v481
        %v614 = vsel %vm612, %v605, %v483
        %v615 = vsel %vm612, %v606, %v485
        %v616 = vsel %vm612, %v607, %v487
        %v617 = vsel %vm612, %v608, %v489
        %v618 = vsel %vm612, %v609, %v491
        %v619 = vsel %vm612, %v610, %v493
        %v620 = vsel %vm612, %v611, %v495
        %vm621 = vcmask 457728
        %v622 = vsel %vm621, %v613, %v513
        %v623 = vsel %vm621, %v614, %v515
        %v624 = vsel %vm621, %v615, %v517
        %v625 = vsel %vm621, %v616, %v519
        %v626 = vsel %vm621, %v617, %v521
        %v627 = vsel %vm621, %v618, %v523
        %v628 = vsel %vm621, %v619, %v525
        %v629 = vsel %vm621, %v620, %v527
        %vm630 = vcmask 523264
        %v631 = vsel %vm630, %v622, %v545
        %v632 = vsel %vm630, %v623, %v547
        %v633 = vsel %vm630, %v624, %v549
        %v634 = vsel %vm630, %v625, %v551
        %v635 = vsel %vm630, %v626, %v553
        %v636 = vsel %vm630, %v627, %v555
        %v637 = vsel %vm630, %v628, %v557
        %v638 = vsel %vm630, %v629, %v559
        %v639 = vpack.c.bf16 %v632, %v631
        %v640 = vpack.c.bf16 %v634, %v633
        %v641 = vpack.c.bf16 %v636, %v635
        %v642 = vpack.c.bf16 %v638, %v637
        %v643 = vld [vmem:[%s1] sm:$0xf]
        %v644 = vld [vmem:[%s1 + $0x4] sm:$0xf]
        %v645 = vld [vmem:[%s1 + $0x8] sm:$0xf]
        %v646 = vld [vmem:[%s1 + $0xc] sm:$0xf]
        %v647 = vld [vmem:[%s1 + $0x10] sm:$0xf]
        %v648 = vld [vmem:[%s1 + $0x14] sm:$0xf]
        %v649 = vld [vmem:[%s1 + $0x18] sm:$0xf]
        %v650 = vld [vmem:[%s1 + $0x1c] sm:$0xf]
        %v651 = vld [vmem:[%s1 + $0x20] sm:$0xf]
        %v652 = vld [vmem:[%s2] sm:$0x1]
        %v654 = vlaneseq
        %v655 = vshrl.u32 %v654, 7
        %v656 = vsub.s32 0, %v655
        %v657 = vrot.slane %v652, %v656
        %v668 = vunpack.c.l.b16 %v643
        %v669 = vunpack.c.l.b16 %v644
        %v670 = vunpack.c.l.b16 %v645
        %v671 = vunpack.c.l.b16 %v646
        %v672 = vunpack.c.l.b16 %v647
        %v673 = vunpack.c.l.b16 %v648
        %v674 = vunpack.c.l.b16 %v649
        %v675 = vunpack.c.l.b16 %v650
        %v676 = vunpack.c.l.b16 %v651
        %v677 = vpack.c.b16 %v669, %v668
        %v678 = vpack.c.b16 %v671, %v670
        %v679 = vpack.c.b16 %v673, %v672
        %v680 = vpack.c.b16 %v675, %v674
        %v681 = vpack.c.b16 %v676, %v676
        %vm686 = vcmask 588800
        %v688 = vsel %vm686, %v639, 0
        %v691 = vsel %vm686, %v640, 0
        %v694 = vsel %vm686, %v641, 0
        %v697 = vsel %vm686, %v642, 0
        %vm699 = vcmask 1043456
        %v701 = vsel %vm699, %v681, 0
        %703 = vmatprep.subr.bf16.mxu0 0
        %704 = vmatpush1.bf16.msra.mxu0 %v677
        %705 = vmatprep.subr.bf16.mxu0 0
        %706 = vmatpush1.bf16.msra.mxu0 %v678
        %707 = vmatprep.subr.bf16.mxu0 0
        %708 = vmatpush1.bf16.msra.mxu0 %v679
        %709 = vmatprep.subr.bf16.mxu0 0
        %710 = vmatpush1.bf16.msra.mxu0 %v680
        %711 = vmatprep.subr.bf16.mxu0 0
        %712 = vmatpush1.bf16.msra.mxu0 %v701
        %713 = vmatprep.subr.bf16.mxu0 0
        %714 = vmatpush1.bf16.msra.mxu0 0
        %715 = vmatprep.subr.bf16.mxu0 0
        %716 = vmatpush1.bf16.msra.mxu0 0
        %717 = vmatprep.subr.bf16.mxu0 0
        %718 = vmatpush1.bf16.msra.mxu0 0
        %719 = vmatprep.subr.bf16.mxu0 0
        %720 = vmatpush1.bf16.msra.mxu0 0
        %721 = vmatprep.subr.bf16.mxu0 0
        %722 = vmatpush1.bf16.msra.mxu0 0
        %723 = vmatprep.subr.bf16.mxu0 0
        %724 = vmatpush1.bf16.msra.mxu0 0
        %725 = vmatprep.subr.bf16.mxu0 0
        %726 = vmatpush1.bf16.msra.mxu0 0
        %727 = vmatprep.subr.bf16.mxu0 0
        %728 = vmatpush1.bf16.msra.mxu0 0
        %729 = vmatprep.subr.bf16.mxu0 0
        %730 = vmatpush1.bf16.msra.mxu0 0
        %731 = vmatprep.subr.bf16.mxu0 0
        %732 = vmatpush1.bf16.msra.mxu0 0
        %733 = vmatprep.subr.bf16.mxu0 0
        %734 = vmatpush1.bf16.msra.mxu0 0
        %735 = vmatprep.mubr.bf16.mxu0 0
        %736 = vmatmul.mubr.bf16.gmra.mrb[0].mxu0 %v688
        %v737 = vpop.f32.mrb[0].mxu0
        %v738 = vadd.f32 %v657, %v737
        %v739 = vpop.f32.mrb[0].mxu0
        %v740 = vpop.f32.mrb[0].mxu0
        %v741 = vadd.f32 %v657, %v740
        %v742 = vpop.f32.mrb[0].mxu0
        %743 = vmatprep.mubr.bf16.mxu0 0
        %744 = vmatmul.mubr.bf16.gmra.mrb[0].mxu0 %v691
        %v745 = vpop.f32.mrb[0].mxu0
        %v746 = vadd.f32 %v657, %v745
        %v747 = vpop.f32.mrb[0].mxu0
        %v748 = vpop.f32.mrb[0].mxu0
        %v749 = vadd.f32 %v657, %v748
        %v750 = vpop.f32.mrb[0].mxu0
        %751 = vmatprep.mubr.bf16.mxu0 0
        %752 = vmatmul.mubr.bf16.gmra.mrb[0].mxu0 %v694
        %v753 = vpop.f32.mrb[0].mxu0
        %v754 = vadd.f32 %v657, %v753
        %v755 = vpop.f32.mrb[0].mxu0
        %v756 = vpop.f32.mrb[0].mxu0
        %v757 = vadd.f32 %v657, %v756
        %v758 = vpop.f32.mrb[0].mxu0
        %759 = vmatprep.mubr.bf16.mxu0 0
        %760 = vmatmul.mubr.bf16.gmra.mrb[0].mxu0 %v697
        %v761 = vpop.f32.mrb[0].mxu0
        %v762 = vadd.f32 %v657, %v761
        %v763 = vpop.f32.mrb[0].mxu0
        %v764 = vpop.f32.mrb[0].mxu0
        %v765 = vadd.f32 %v657, %v764
        %v766 = vpop.f32.mrb[0].mxu0
        %767 = vdwg.mxu0
        %v768 = vpack.c.bf16 %v741, %v738
        %v769 = vpack.c.bf16 %v749, %v746
        %v770 = vpack.c.bf16 %v757, %v754
        %v771 = vpack.c.bf16 %v765, %v762
        %v776 = vunpack.c.l.b16 %v768
        %v777 = vunpack.c.h.b16 %v768
        %v778 = vunpack.c.l.b16 %v769
        %v779 = vunpack.c.h.b16 %v769
        %v780 = vunpack.c.l.b16 %v770
        %v781 = vunpack.c.h.b16 %v770
        %v782 = vunpack.c.l.b16 %v771
        %v783 = vunpack.c.h.b16 %v771
        %v784 = vpack.c.b16 %v776, %v776
        %v785 = vpack.c.b16 %v777, %v777
        %v786 = vpack.c.b16 %v778, %v778
        %v787 = vpack.c.b16 %v779, %v779
        %v788 = vpack.c.b16 %v780, %v780
        %v789 = vpack.c.b16 %v781, %v781
        %v790 = vpack.c.b16 %v782, %v782
        %v791 = vpack.c.b16 %v783, %v783
        %vm800 = vcmask 125952
        %801 = vst.msk [vmem:[%s190] sm:$0xf] %vm800, %v784
        %802 = vst.msk [vmem:[%s190 + $0x4] sm:$0xf] %vm800, %v785
        %803 = vst.msk [vmem:[%s190 + $0x8] sm:$0xf] %vm800, %v786
        %804 = vst.msk [vmem:[%s190 + $0xc] sm:$0xf] %vm800, %v787
        %805 = vst.msk [vmem:[%s190 + $0x10] sm:$0xf] %vm800, %v788
        %806 = vst.msk [vmem:[%s190 + $0x14] sm:$0xf] %vm800, %v789
        %807 = vst.msk [vmem:[%s190 + $0x18] sm:$0xf] %vm800, %v790
        %808 = vst.msk [vmem:[%s190 + $0x1c] sm:$0xf] %vm800, %v791
        %p809 = scmp.lt.s32.totalorder %s17, 1
        %s810 = scalar_select %p809, %s17, 1
        %s811 = smul.addr %s810, 8
        %s812 = smul.addr %s811, 4
        %s813 = scalar_lea.vmem %s3, %s812
        // Predicated region
        $region37: #{tpu_custom_call.1} parent=31 // pred_check
          %p814 = pneg %p103
        $region38: #{tpu_custom_call.1} parent=31 // pred_check_branch
          %816 = sbr.rel (%p814) target = $region40
        $region39: #{tpu_custom_call.1} parent=31 // pred_region
          _
        $region40: #{tpu_custom_call.1} parent=31 // pred_fallthru
          _
      $region32: #{tpu_custom_call.1} parent=5 // pred_fallthru
        _
      %p817 = scmp.le.s32.totalorder 2, %s12
      // Predicated region
      $region41: #{tpu_custom_call.1} parent=5 // pred_check
        %p818 = pneg %p817
      $region42: #{tpu_custom_call.1} parent=5 // pred_check_branch
        %820 = sbr.rel (%p818) target = $region44
      $region43: #{tpu_custom_call.1} parent=5 // pred_region
        %s821 = ssub.s32 %s12, 2
        // Predicated region
        $region45: #{tpu_custom_call.1} parent=43 // pred_check
          %p822 = pneg %p109
        $region46: #{tpu_custom_call.1} parent=43 // pred_check_branch
          %824 = sbr.rel (%p822) target = $region48
        $region47: #{tpu_custom_call.1} parent=43 // pred_region
          %p825 = scmp.lt.s32.totalorder %s18, 1
          %s826 = scalar_select %p825, %s18, 1
          %s827 = smul.addr %s826, 8
          %s828 = smul.addr %s827, 4
          %s829 = scalar_lea.vmem %s3, %s828
        $region48: #{tpu_custom_call.1} parent=43 // pred_fallthru
          _
      $region44: #{tpu_custom_call.1} parent=5 // pred_fallthru
        _
    $region6: #{tpu_custom_call.1} parent=1 // loop_footer
      %s16 = sadd.s32 1, %s12
    $region7: #{tpu_custom_call.1} parent=1 // loop_footer_branch
      %11 = sbr.rel target = $region3
    $region8: #{tpu_custom_call.1} parent=1 // loop_exit
      _
    %830 = vsyncpa [#allocation4], 1
    %s831 = scalar_lea.sflag [#allocation4], 1
    %832 = vsyncpa %s831, 1

</llo_original>
